<compile_context>
chip_gen: v7x
topology: tpu7x:2x2x1
jax: 0.10.0
libtpu: 0.0.40
codegen_flags: <defaults>
</compile_context>

<pallas_src>
import jax
import jax.numpy as jnp
from jax.experimental import pallas as pl
from jax.experimental.pallas import tpu as pltpu


# ---------------------------------------------------------------------------
# Diffusion schedule (plain JAX glue; mirrors GaussianDiffusion.__init__)
# ---------------------------------------------------------------------------
def sigmoid_beta_schedule(timesteps, start=-3.0, end=3.0, tau=1.0):
    steps = timesteps + 1
    t = jnp.linspace(0.0, float(timesteps), steps) / float(timesteps)
    v_start = jax.nn.sigmoid(jnp.asarray(start / tau, jnp.float32))
    v_end = jax.nn.sigmoid(jnp.asarray(end / tau, jnp.float32))
    ac = (-jax.nn.sigmoid((t * (end - start) + start) / tau) + v_end) / (
        v_end - v_start
    )
    ac = ac / ac[0]
    betas = 1.0 - ac[1:] / ac[:-1]
    return jnp.clip(betas, 0.0, 0.999)


def make_schedule(timesteps):
    betas = sigmoid_beta_schedule(timesteps)
    alphas = 1.0 - betas
    ac = jnp.cumprod(alphas, axis=0)
    sqrt_ac = jnp.sqrt(ac)
    sqrt_om = jnp.sqrt(1.0 - ac)
    snr = ac / (1.0 - ac)
    loss_weight = snr / (snr + 1.0)
    return sqrt_ac, sqrt_om, loss_weight


def sinusoidal_time_embedding(t, dim):
    half = dim // 2
    freqs = jnp.exp(-jnp.log(10000.0) * jnp.arange(half, dtype=jnp.float32) / half)
    args = t.astype(jnp.float32)[:, None] * freqs[None, :]
    return jnp.concatenate([jnp.sin(args), jnp.cos(args)], axis=-1)  # (B, dim)


# ---------------------------------------------------------------------------
# Pallas kernel: fused q_sample + model + predict_v + weighted MSE
# One grid step processes BB batch items laid out densely as (BB*C, HW),
# HW on the lane axis.  No per-item loop; one reduction per step.
# ---------------------------------------------------------------------------
def _diffusion_loss_kernel(coef_ref, x_ref, n_ref, wbd_ref, out_ref):
    # coef_ref : VMEM (4, R, 1)  rows broadcast over lanes:
    #            [0]=sqrt_ac[t], [1]=sqrt_1m_ac[t],
    #            [2]=loss_weight[t]/(B*C*HW), [3]=conv bias + time-emb proj
    # x_ref    : VMEM (R, HW)   f32 clean image rows (r = b*C + c)
    # n_ref    : VMEM (R, HW)   f32 gaussian noise
    # wbd_ref  : VMEM (R, R)    block-diagonal 1x1-conv weight (kron(I, W))
    # out_ref  : VMEM (1,1,128) per-grid-step partial loss (lane-dense slab)
    x = x_ref[...]                       # (R, HW)
    nz = n_ref[...]                      # (R, HW)

    sa = coef_ref[0]                     # (R, 1)
    som = coef_ref[1]                    # (R, 1)
    lw = coef_ref[2]                     # (R, 1)  loss_weight/(B*C*HW)
    tb = coef_ref[3]                     # (R, 1)  bias + time embedding

    # q_sample
    x_noisy = sa * x + som * nz

    # synthetic model: 1x1 conv over channels as ONE block-diag MXU matmul
    pred = jnp.dot(wbd_ref[...], x_noisy, preferred_element_type=jnp.float32)
    pred = pred + tb                     # (R, 1) broadcast over lanes

    # predict_v target + weighted squared error, single reduction per step
    target = sa * nz - som * x
    diff = pred - target
    partial = jnp.sum(diff * diff * lw)

    # lane-dense unmasked store of the partial sum
    out_ref[...] = jnp.full((1, 1, 128), partial, dtype=jnp.float32)


def _choose_bb(B, C, HW, itemsize=4, budget_bytes=24 << 20):
    """Largest BB dividing B such that (a) BB*C rows are sublane-dense (mult.
    of 8) or the full extent, and (b) double-buffered x+noise blocks stay
    within a VMEM budget that is safe on v7x (64 MiB physical)."""
    per_item = C * HW * itemsize          # one batch item of one input
    best = None
    for bb in range(1, B + 1):
        if B % bb:
            continue
        if (bb * C) % 8 != 0 and bb != B:
            continue
        if 4 * bb * per_item <= budget_bytes:   # 2 inputs x 2 buffers
            best = bb
    return best if best is not None else B


def diffusion_forward_loss(x_nchw, timesteps, noise_nchw, schedule, model_params):
    """Scalar training loss (forward pass of GaussianDiffusion)."""
    sqrt_ac, sqrt_om, loss_weight = schedule
    w_conv, b_conv, w_time = model_params

    B, C, H, W = x_nchw.shape
    HW = H * W

    # free, contiguous reshape (no transpose, no cast, no pad): NCHW -> (B*C, HW)
    x = x_nchw.reshape(B * C, HW).astype(jnp.float32)
    noise = noise_nchw.reshape(B * C, HW).astype(jnp.float32)

    BB = _choose_bb(B, C, HW)
    NB = B // BB
    R = BB * C

    # per-batch coefficient gathers (get_index_from_list), broadcast over C
    # rows so they line up with the (B*C, HW) layout; 1/(B*C*HW) folded in.
    sa_t = jnp.repeat(sqrt_ac[timesteps].astype(jnp.float32), C)
    som_t = jnp.repeat(sqrt_om[timesteps].astype(jnp.float32), C)
    lw_t = jnp.repeat(
        (loss_weight[timesteps] / float(B * C * HW)).astype(jnp.float32), C
    )
    # fold conv bias into the projected time embedding: one value per (b, c)
    emb = sinusoidal_time_embedding(timesteps, w_time.shape[0])
    tb = (emb @ w_time + b_conv[None, :]).reshape(B * C).astype(jnp.float32)
    coef = jnp.stack([sa_t, som_t, lw_t, tb], axis=0).reshape(4, B * C, 1)

    # block-diagonal 1x1-conv weight: ONE MXU push per grid step
    wbd = jnp.kron(jnp.eye(BB, dtype=jnp.float32), w_conv.astype(jnp.float32))

    partial = pl.pallas_call(
        _diffusion_loss_kernel,
        out_shape=jax.ShapeDtypeStruct((NB, 1, 128), jnp.float32),
        grid_spec=pltpu.PrefetchScalarGridSpec(
            num_scalar_prefetch=0,
            grid=(NB,),
            in_specs=[
                pl.BlockSpec((4, R, 1), lambda i: (0, i, 0)),   # coefficients
                pl.BlockSpec((R, HW), lambda i: (i, 0)),        # x
                pl.BlockSpec((R, HW), lambda i: (i, 0)),        # noise
                pl.BlockSpec((R, R), lambda i: (0, 0)),         # block-diag W
            ],
            out_specs=pl.BlockSpec((1, 1, 128), lambda i: (i, 0, 0)),
        ),
        compiler_params=pltpu.CompilerParams(
            # batch blocks are independent; TODO(synk): try pltpu.CORE_PARALLEL
            # on v7x once NB >= 2 at realistic batch sizes.
            dimension_semantics=("parallel",),
            vmem_limit_bytes=48 << 20,
        ),
    )(coef, x, noise, wbd)

    # 1/(B*C*HW) already folded into the weights -> final loss is a plain sum
    return jnp.sum(partial[:, 0, 0])


# ---------------------------------------------------------------------------
# Pure-JAX reference (f32 throughout, matching the kernel's precision)
# ---------------------------------------------------------------------------
def reference_loss(x_nchw, timesteps, noise_nchw, schedule, model_params):
    sqrt_ac, sqrt_om, loss_weight = schedule
    w_conv, b_conv, w_time = model_params
    B, C, H, W = x_nchw.shape
    HW = H * W
    x = x_nchw.reshape(B, C, HW).astype(jnp.float32)
    noise = noise_nchw.reshape(B, C, HW).astype(jnp.float32)
    sa = sqrt_ac[timesteps][:, None, None]
    som = sqrt_om[timesteps][:, None, None]
    lw = loss_weight[timesteps]
    x_noisy = sa * x + som * noise
    emb = sinusoidal_time_embedding(timesteps, w_time.shape[0])
    tb = (emb @ w_time + b_conv[None, :])[:, :, None]
    pred = jnp.einsum("ij,bjp->bip", w_conv, x_noisy) + tb
    target = sa * noise - som * x
    per_batch = jnp.mean((pred - target) ** 2, axis=(1, 2)) * lw
    return jnp.mean(per_batch)


# ---------------------------------------------------------------------------
if __name__ == "__main__":
    B, C, H, W = 2, 4, 16, 16
    T = 1024  # total_timesteps = 2**10
    EMB = 32

    key = jax.random.PRNGKey(0)
    k_x, k_t, k_noise, k_w, k_b, k_wt = jax.random.split(key, 6)

    # forward(x) draws t and noise internally; draw them here with JAX RNG
    x = jax.random.normal(k_x, (B, C, H, W), dtype=jnp.float32)
    timesteps = jax.random.randint(k_t, (B,), 0, T)
    noise = jax.random.normal(k_noise, (B, C, H, W), dtype=jnp.float32)

    # deterministic synthetic model parameters
    w_conv = jax.random.normal(k_w, (C, C), dtype=jnp.float32) * 0.2
    b_conv = jax.random.normal(k_b, (C,), dtype=jnp.float32) * 0.1
    w_time = jax.random.normal(k_wt, (EMB, C), dtype=jnp.float32) * 0.05

    schedule = make_schedule(T)
    model_params = (w_conv, b_conv, w_time)

    loss = diffusion_forward_loss(x, timesteps, noise, schedule, model_params)
    loss = jax.block_until_ready(loss)

    ref = jax.block_until_ready(
        reference_loss(x, timesteps, noise, schedule, model_params)
    )
    assert jnp.isfinite(loss), "loss is not finite"
    assert jnp.allclose(loss, ref, rtol=1e-2, atol=1e-3), (loss, ref)

    print("KERNEL_OK")
</pallas_src>

<mosaic_0001>
module attributes {stable_mosaic.version = 11 : i64} {
  func.func @_diffusion_loss_kernel(%arg0: i32, %arg1: memref<4x8x1xf32, #tpu.memory_space<vmem>>, %arg2: memref<8x256xf32, #tpu.memory_space<vmem>>, %arg3: memref<8x256xf32, #tpu.memory_space<vmem>>, %arg4: memref<8x8xf32, #tpu.memory_space<vmem>>, %arg5: memref<1x1x128xf32, #tpu.memory_space<vmem>>) attributes {dimension_semantics = [#tpu.dimension_semantics<parallel>], iteration_bounds = array<i64: 1>, scalar_prefetch = 0 : i64, scratch_operands = 0 : i64, tpu.core_type = #tpu.core_type<tc>, window_params = [{transform_indices = @transform_0, window_bounds = array<i64: 4, 8, 1>}, {transform_indices = @transform_1, window_bounds = array<i64: 8, 256>}, {transform_indices = @transform_2, window_bounds = array<i64: 8, 256>}, {pipeline_mode = #tpu.pipeline_mode<synchronous>, transform_indices = @transform_3, window_bounds = array<i64: 8, 8>}, {transform_indices = @transform_4, window_bounds = array<i64: 1, 1, 128>}]} {
    %c0 = arith.constant 0 : index
    %c0_0 = arith.constant 0 : index
    %0 = vector.load %arg2[%c0, %c0_0] : memref<8x256xf32, #tpu.memory_space<vmem>>, vector<8x256xf32>
    %c0_1 = arith.constant 0 : index
    %c0_2 = arith.constant 0 : index
    %1 = vector.load %arg3[%c0_1, %c0_2] : memref<8x256xf32, #tpu.memory_space<vmem>>, vector<8x256xf32>
    %c0_3 = arith.constant 0 : index
    %c0_4 = arith.constant 0 : index
    %c0_5 = arith.constant 0 : index
    %2 = vector.load %arg1[%c0_3, %c0_4, %c0_5] : memref<4x8x1xf32, #tpu.memory_space<vmem>>, vector<1x8x1xf32>
    %3 = vector.shape_cast %2 : vector<1x8x1xf32> to vector<8x1xf32>
    %c1 = arith.constant 1 : index
    %c0_6 = arith.constant 0 : index
    %c0_7 = arith.constant 0 : index
    %4 = vector.load %arg1[%c1, %c0_6, %c0_7] : memref<4x8x1xf32, #tpu.memory_space<vmem>>, vector<1x8x1xf32>
    %5 = vector.shape_cast %4 : vector<1x8x1xf32> to vector<8x1xf32>
    %c2 = arith.constant 2 : index
    %c0_8 = arith.constant 0 : index
    %c0_9 = arith.constant 0 : index
    %6 = vector.load %arg1[%c2, %c0_8, %c0_9] : memref<4x8x1xf32, #tpu.memory_space<vmem>>, vector<1x8x1xf32>
    %7 = vector.shape_cast %6 : vector<1x8x1xf32> to vector<8x1xf32>
    %c3 = arith.constant 3 : index
    %c0_10 = arith.constant 0 : index
    %c0_11 = arith.constant 0 : index
    %8 = vector.load %arg1[%c3, %c0_10, %c0_11] : memref<4x8x1xf32, #tpu.memory_space<vmem>>, vector<1x8x1xf32>
    %9 = vector.shape_cast %8 : vector<1x8x1xf32> to vector<8x1xf32>
    %10 = vector.broadcast %3 : vector<8x1xf32> to vector<8x256xf32>
    %11 = arith.mulf %10, %0 : vector<8x256xf32>
    %12 = vector.broadcast %5 : vector<8x1xf32> to vector<8x256xf32>
    %13 = arith.mulf %12, %1 : vector<8x256xf32>
    %14 = arith.addf %11, %13 : vector<8x256xf32>
    %c0_12 = arith.constant 0 : index
    %c0_13 = arith.constant 0 : index
    %15 = vector.load %arg4[%c0_12, %c0_13] : memref<8x8xf32, #tpu.memory_space<vmem>>, vector<8x8xf32>
    %cst = arith.constant dense<0.000000e+00> : vector<8x256xf32>
    %16 = tpu.matmul %15, %14, %cst {dimension_numbers = #tpu.dot_dimension_numbers<[1], [0], [0], [1], [0, 0, 1, 1], [], []>} : vector<8x8xf32>, vector<8x256xf32>, vector<8x256xf32> -> vector<8x256xf32>
    %17 = vector.broadcast %9 : vector<8x1xf32> to vector<8x256xf32>
    %18 = arith.addf %16, %17 : vector<8x256xf32>
    %19 = vector.broadcast %3 : vector<8x1xf32> to vector<8x256xf32>
    %20 = arith.mulf %19, %1 : vector<8x256xf32>
    %21 = vector.broadcast %5 : vector<8x1xf32> to vector<8x256xf32>
    %22 = arith.mulf %21, %0 : vector<8x256xf32>
    %23 = arith.subf %20, %22 : vector<8x256xf32>
    %24 = arith.subf %18, %23 : vector<8x256xf32>
    %25 = arith.mulf %24, %24 : vector<8x256xf32>
    %26 = vector.broadcast %7 : vector<8x1xf32> to vector<8x256xf32>
    %27 = arith.mulf %25, %26 : vector<8x256xf32>
    %28 = vector.shape_cast %27 : vector<8x256xf32> to vector<1x8x256xf32>
    %cst_14 = arith.constant dense<0.000000e+00> : vector<1xf32>
    %29 = vector.multi_reduction <add>, %28, %cst_14 [1, 2] : vector<1x8x256xf32> to vector<1xf32>
    %30 = vector.shape_cast %29 : vector<1xf32> to vector<1x1x1xf32>
    %31 = vector.extract %30[0, 0, 0] : f32 from vector<1x1x1xf32>
    %32 = vector.broadcast %31 : f32 to vector<1x1x128xf32>
    %c0_15 = arith.constant 0 : index
    %c0_16 = arith.constant 0 : index
    %c0_17 = arith.constant 0 : index
    %33 = vector.load %arg5[%c0_15, %c0_16, %c0_17] : memref<1x1x128xf32, #tpu.memory_space<vmem>>, vector<1x1x128xf32>
    tpu.vector_store %arg5[%c0_15, %c0_16, %c0_17], %32 {strides = array<i32>} : memref<1x1x128xf32, #tpu.memory_space<vmem>>, vector<1x1x128xf32>,
    return
  }
  func.func @transform_0(%arg0: i32) -> (i32, i32, i32) {
    %c0_i32 = arith.constant 0 : i32
    %c0_i32_0 = arith.constant 0 : i32
    %c0_i32_1 = arith.constant 0 : i32
    return %c0_i32, %arg0, %c0_i32_0 : i32, i32, i32
  }
  func.func @transform_1(%arg0: i32) -> (i32, i32) {
    %c0_i32 = arith.constant 0 : i32
    %c0_i32_0 = arith.constant 0 : i32
    return %arg0, %c0_i32 : i32, i32
  }
  func.func @transform_2(%arg0: i32) -> (i32, i32) {
    %c0_i32 = arith.constant 0 : i32
    %c0_i32_0 = arith.constant 0 : i32
    return %arg0, %c0_i32 : i32, i32
  }
  func.func @transform_3(%arg0: i32) -> (i32, i32) {
    %c0_i32 = arith.constant 0 : i32
    %c0_i32_0 = arith.constant 0 : i32
    %c0_i32_1 = arith.constant 0 : i32
    return %c0_i32, %c0_i32_0 : i32, i32
  }
  func.func @transform_4(%arg0: i32) -> (i32, i32, i32) {
    %c0_i32 = arith.constant 0 : i32
    %c0_i32_0 = arith.constant 0 : i32
    %c0_i32_1 = arith.constant 0 : i32
    return %arg0, %c0_i32, %c0_i32_0 : i32, i32, i32
  }
}

</mosaic_0001>

<llo_original>
// kernel: tpu_custom_call.1
$region0: #{tpu_custom_call.1}
  #allocation0 [shape = 'u32[]', space=smem, size = 0x4, offset = 0x4, fixed_abs, tag = 'smem constant byte address 0x4 - core index']
  #allocation1 [shape = 'u32[144,128]{1,0:T(1,128)}', space=vmem, size = 0x12000, scoped, tag = 'internal scratch']
  %s0 = inlined_call_operand.vmem [shape: f32[4,8,1], index: 0, kind: input, shape index: {}]
  %s1 = inlined_call_operand.vmem [shape: f32[8,256], index: 1, kind: input, shape index: {}]
  %s2 = inlined_call_operand.vmem [shape: f32[8,256], index: 2, kind: input, shape index: {}]
  %s3 = inlined_call_operand.vmem [shape: f32[8,8], index: 3, kind: input, shape index: {}]
  %s4 = inlined_call_operand.hbm [shape: f32[1,1,128], index: 4, kind: output, shape index: {}]
  %s5 = sld [smem:[#allocation0]]
  $region26: #{tpu_custom_call.1} parent=0
    _
  %s7 = ssub.s32 1, %s5
  %s8 = scalar_select 0, %s7, %s5
  $region1: #{tpu_custom_call.1} parent=0
    #allocation2 [shape = 'u8[512]{0}', space=vmem, size = 0x400, scoped, tag = 'output window, operand 0, single buffered']
    #allocation3 [shape = 's32[1]{0}', space=sflag, size = 0x4, scoped, tag = 'scoped memory for tpu_custom_call.1']
    %9 = vsyncpa [#allocation3], 0
    // Predicated region
    $region2: #{tpu_custom_call.1} parent=1 // pred_check
      _
    $region3: #{tpu_custom_call.1} parent=1 // pred_check_branch
      %11 = sbr.rel (0) target = $region5
    $region4: #{tpu_custom_call.1} parent=1 // pred_region
      _
    $region5: #{tpu_custom_call.1} parent=1 // pred_fallthru
      _
    // Predicated region
    $region6: #{tpu_custom_call.1} parent=1 // pred_check
      _
    $region7: #{tpu_custom_call.1} parent=1 // pred_check_branch
      %13 = sbr.rel (0) target = $region9
    $region8: #{tpu_custom_call.1} parent=1 // pred_region
      _
    $region9: #{tpu_custom_call.1} parent=1 // pred_fallthru
      _
    // Predicated region
    $region10: #{tpu_custom_call.1} parent=1 // pred_check
      _
    $region11: #{tpu_custom_call.1} parent=1 // pred_check_branch
      %15 = sbr.rel (0) target = $region13
    $region12: #{tpu_custom_call.1} parent=1 // pred_region
      _
    $region13: #{tpu_custom_call.1} parent=1 // pred_fallthru
      _
    // Predicated region
    $region14: #{tpu_custom_call.1} parent=1 // pred_check
      _
    $region15: #{tpu_custom_call.1} parent=1 // pred_check_branch
      %17 = sbr.rel (0) target = $region17
    $region16: #{tpu_custom_call.1} parent=1 // pred_region
      _
    $region17: #{tpu_custom_call.1} parent=1 // pred_fallthru
      _
    %v18 = vld [vmem:[%s1] sm:$0xff]
    %v19 = vld [vmem:[%s1 + $0x8] sm:$0xff]
    %v20 = vld [vmem:[%s2] sm:$0xff]
    %v21 = vld [vmem:[%s2 + $0x8] sm:$0xff]
    %v22 = vld [vmem:[%s0] sm:$0xff]
    %s23 = scalar_lea.vmem %s0, 8
    %v24 = vld [vmem:[%s23] sm:$0xff]
    %s25 = scalar_lea.vmem %s0, 16
    %v26 = vld [vmem:[%s25] sm:$0xff]
    %s27 = scalar_lea.vmem %s0, 24
    %v28 = vld [vmem:[%s27] sm:$0xff]
    %30 = vset.pattern.permute.xlu0 0
    %31 = vperm.xlu0 %30, %v22
    %v32 = vpop.permute.xlu0 %31
    %v34 = vmul.f32 %v32, %v18
    %v35 = vmul.f32 %v32, %v19
    %37 = vset.pattern.permute.xlu0 0
    %38 = vperm.xlu0 %37, %v24
    %v39 = vpop.permute.xlu0 %38
    %v41 = vmul.f32 %v39, %v20
    %v42 = vmul.f32 %v39, %v21
    %v43 = vadd.f32 %v34, %v41
    %v44 = vadd.f32 %v35, %v42
    %v45 = vld [vmem:[%s3] sm:$0xff]
    %47 = vset.pattern.permute.xlu0 0
    %48 = vperm.xlu0 %47, %v28
    %v49 = vpop.permute.xlu0 %48
    %vm51 = vcmask 64512
    %v53 = vsel %vm51, %v45, 0
    %55 = vmatprep.subr.mxu0 %v44
    %56 = vmatpush1.msra.mxu0 %v43
    %57 = vmatprep.subr.mxu0 0.0
    %58 = vmatpush1.msra.mxu0 0.0
    %59 = vmatprep.subr.mxu0 0.0
    %60 = vmatpush1.msra.mxu0 0.0
    %61 = vmatprep.subr.mxu0 0.0
    %62 = vmatpush1.msra.mxu0 0.0
    %63 = vmatprep.subr.mxu0 0.0
    %64 = vmatpush1.msra.mxu0 0.0
    %65 = vmatprep.subr.mxu0 0.0
    %66 = vmatpush1.msra.mxu0 0.0
    %67 = vmatprep.subr.mxu0 0.0
    %68 = vmatpush1.msra.mxu0 0.0
    %69 = vmatprep.subr.mxu0 0.0
    %70 = vmatpush1.msra.mxu0 0.0
    %71 = vmatprep.subr.mxu0 0.0
    %72 = vmatpush1.msra.mxu0 0.0
    %73 = vmatprep.subr.mxu0 0.0
    %74 = vmatpush1.msra.mxu0 0.0
    %75 = vmatprep.subr.mxu0 0.0
    %76 = vmatpush1.msra.mxu0 0.0
    %77 = vmatprep.subr.mxu0 0.0
    %78 = vmatpush1.msra.mxu0 0.0
    %79 = vmatprep.subr.mxu0 0.0
    %80 = vmatpush1.msra.mxu0 0.0
    %81 = vmatprep.subr.mxu0 0.0
    %82 = vmatpush1.msra.mxu0 0.0
    %83 = vmatprep.subr.mxu0 0.0
    %84 = vmatpush1.msra.mxu0 0.0
    %85 = vmatprep.subr.mxu0 0.0
    %86 = vmatpush1.msra.mxu0 0.0
    %87 = vmatprep.subr.mxu0 0.0
    %88 = vmatpush1.msra.mxu0 0.0
    %89 = vmatprep.subr.mxu0 0.0
    %90 = vmatpush1.msra.mxu0 0.0
    %91 = vmatprep.subr.mxu0 0.0
    %92 = vmatpush1.msra.mxu0 0.0
    %93 = vmatprep.subr.mxu0 0.0
    %94 = vmatpush1.msra.mxu0 0.0
    %95 = vmatprep.subr.mxu0 0.0
    %96 = vmatpush1.msra.mxu0 0.0
    %97 = vmatprep.subr.mxu0 0.0
    %98 = vmatpush1.msra.mxu0 0.0
    %99 = vmatprep.subr.mxu0 0.0
    %100 = vmatpush1.msra.mxu0 0.0
    %101 = vmatprep.subr.mxu0 0.0
    %102 = vmatpush1.msra.mxu0 0.0
    %103 = vmatprep.subr.mxu0 0.0
    %104 = vmatpush1.msra.mxu0 0.0
    %105 = vmatprep.subr.mxu0 0.0
    %106 = vmatpush1.msra.mxu0 0.0
    %107 = vmatprep.subr.mxu0 0.0
    %108 = vmatpush1.msra.mxu0 0.0
    %109 = vmatprep.subr.mxu0 0.0
    %110 = vmatpush1.msra.mxu0 0.0
    %111 = vmatprep.subr.mxu0 0.0
    %112 = vmatpush1.msra.mxu0 0.0
    %113 = vmatprep.subr.mxu0 0.0
    %114 = vmatpush1.msra.mxu0 0.0
    %115 = vmatprep.subr.mxu0 0.0
    %116 = vmatpush1.msra.mxu0 0.0
    %117 = vmatprep.subr.mxu0 0.0
    %118 = vmatpush1.msra.mxu0 0.0
    %119 = vmatprep.mubr.f32.mxu0 0.0
    %120 = vmatmul.mubr.f32.gmra.mrb[0].mxu0 %v53
    %v121 = vpop.f32.mrb[0].mxu0
    %v122 = vadd.f32 %v49, %v121
    %v123 = vpop.f32.mrb[0].mxu0
    %v124 = vadd.f32 %v49, %v123
    %125 = vdwg.mxu0
    %v126 = vmul.f32 %v32, %v20
    %v127 = vmul.f32 %v32, %v21
    %v128 = vmul.f32 %v39, %v18
    %v129 = vmul.f32 %v39, %v19
    %v130 = vsub.f32 %v126, %v128
    %v131 = vsub.f32 %v127, %v129
    %v132 = vsub.f32 %v122, %v130
    %v133 = vsub.f32 %v124, %v131
    %v134 = vmul.f32 %v132, %v132
    %v135 = vmul.f32 %v133, %v133
    %137 = vset.pattern.permute.xlu0 0
    %138 = vperm.xlu0 %137, %v26
    %v139 = vpop.permute.xlu0 %138
    %v141 = vmul.f32 %v134, %v139
    %v142 = vmul.f32 %v135, %v139
    %v143 = vadd.f32 %v141, %v142
    %144 = vadd.xlane.f32.xlu0 %v143
    %v145 = vpop.xlane.xlu0 %144
    %v146 = vrot.slane %v145, 4
    %v147 = vadd.f32 %v145, %v146
    %v148 = vrot.slane %v147, 2
    %v149 = vadd.f32 %v147, %v148
    %v150 = vrot.slane %v149, 1
    %v151 = vadd.f32 %v149, %v150
    %s152 = vtos %v151
    %v153 = vstv %s152
    %154 = vst [vmem:[#allocation2] sm:$0x1] %v153
    // Predicated region
    $region18: #{tpu_custom_call.1} parent=1 // pred_check
      _
    $region19: #{tpu_custom_call.1} parent=1 // pred_check_branch
      %156 = sbr.rel (0) target = $region21
    $region20: #{tpu_custom_call.1} parent=1 // pred_region
      %s158 = ssub.s32 16, 16
      %159 = vsyncadd [#allocation3], %s158
      %s161 = sshll.u32 [#allocation2], 4
      %s162 = int_to_ptr.vmem [resolvable:$true] %s161
      %164 = dma.vmem_to_hbm [thread:$0]  %s162, 16, %s4, [#allocation3]
    $region21: #{tpu_custom_call.1} parent=1 // pred_fallthru
      _
    // Predicated region
    $region22: #{tpu_custom_call.1} parent=1 // pred_check
      _
    $region23: #{tpu_custom_call.1} parent=1 // pred_check_branch
      %166 = sbr.rel (0) target = $region25
    $region24: #{tpu_custom_call.1} parent=1 // pred_region
      %167 = dma.done [#allocation3], 16
    $region25: #{tpu_custom_call.1} parent=1 // pred_fallthru
      _
    %168 = vsyncpa [#allocation3], 1

</llo_original>
